<compile_context>
chip_gen: v7x
topology: tpu7x:2x2x1
jax: 0.10.0
libtpu: 0.0.40
codegen_flags: <defaults>
</compile_context>

<pallas_src>
import math

import jax
import jax.numpy as jnp
import numpy as np
from jax.experimental import pallas as pl
from jax.experimental.pallas import tpu as pltpu

INPUT_SIZE = 50          # (L-1)//2+1 + (L-3)//2+1 + (L-5)//2+1 = 72  ->  fc1 in = 4*72
N_CH = 4
KSIZES = (1, 3, 5)
STRIDE = 2
NEG_SLOPE = 0.2
FEAT = N_CH * 72         # 288 real flattened features
FEAT_PAD = 384           # padded to 3*128 lanes
DEFAULT_BT = 1024        # default batch-tile rows (multiple of 8 f32 sublanes)


def _conv_out_len(L, K, s=STRIDE):
    return (L - K) // s + 1


def _round_up(n, m):
    return ((n + m - 1) // m) * m


# ----------------------------- Pallas kernel ---------------------------------

def _kernel(x_ref, wband_ref, brow_ref, wfold_ref, bfold_ref, out_ref):
    # x_ref:     (BT, L)       f32  streamed batch tile (double-buffered by Pallas)
    # wband_ref: (L, 384)      f32  conv1/2/3 as one band matrix (288 live columns)
    # brow_ref:  (1, 384)      f32  conv biases broadcast over flattened positions
    # wfold_ref: (384, 1)      f32  fc1_w^T @ fc2_w^T (zero rows beyond 288)
    # bfold_ref: (1, 1)        f32  fc1_b @ fc2_w^T + fc2_b
    x = x_ref[...]
    pre = jnp.dot(x, wband_ref[...], preferred_element_type=jnp.float32) + brow_ref[...]
    act = jnp.where(pre >= 0, pre, NEG_SLOPE * pre)        # LeakyReLU(0.2), once
    out = jnp.dot(act, wfold_ref[...], preferred_element_type=jnp.float32) + bfold_ref[...]
    out_ref[...] = out.astype(out_ref.dtype)


# --------------------------- host-side weight prep ----------------------------

def _conv_tap_bases(L):
    """Constant 0/1 bases E_K[k, j, t] = 1 iff input position j feeds output t via tap k."""
    bases = []
    for K in KSIZES:
        lout = _conv_out_len(L, K)
        E = np.zeros((K, L, lout), np.float32)
        for k in range(K):
            for t in range(lout):
                E[k, 2 * t + k, t] = 1.0
        bases.append(jnp.asarray(E))
    return bases


def _prepare_weights(params, L):
    """Band matrix + bias row + folded fc weights (tiny, done once outside the kernel)."""
    louts = tuple(_conv_out_len(L, K) for K in KSIZES)
    assert sum(louts) == 72, "fc1 expects 4*72 features"

    bases = _conv_tap_bases(L)
    conv_ws = (params["conv1_w"], params["conv2_w"], params["conv3_w"])
    conv_bs = (params["conv1_b"], params["conv2_b"], params["conv3_b"])

    # per_conv[i]: (N_CH, L, lout_i) with value w_i[c, k] at row 2t+k, col t
    per_conv = [jnp.einsum("ck,klt->clt", w, E) for w, E in zip(conv_ws, bases)]
    # channel-major flatten (c*72 + t), matching torch.flatten(torch.cat((x1,x2,x3),-1), 1)
    per_channel = [jnp.concatenate([per_conv[0][c], per_conv[1][c], per_conv[2][c]], axis=-1)
                   for c in range(N_CH)]
    w_band = jnp.concatenate(per_channel, axis=-1)                 # (L, 288)
    w_band = jnp.pad(w_band, ((0, 0), (0, FEAT_PAD - FEAT)))       # (L, 384) lane-dense

    b_seg = jnp.concatenate(
        [jnp.repeat(conv_bs[i][:, None], louts[i], axis=1) for i in range(3)], axis=1)
    b_row = jnp.pad(b_seg.reshape(1, FEAT), ((0, 0), (0, FEAT_PAD - FEAT)))  # (1, 384)

    # No activation between fc1 and fc2 in the PyTorch module -> exact linear fold.
    w_fold = params["fc1_w"].T @ params["fc2_w"].T                 # (288, 1)
    w_fold = jnp.pad(w_fold, ((0, FEAT_PAD - FEAT), (0, 0)))       # (384, 1)
    b_fold = (params["fc1_b"] @ params["fc2_w"].T + params["fc2_b"]).reshape(1, 1)
    return w_band, b_row, w_fold, b_fold


# --------------------------------- wrapper ------------------------------------

def cnn_regressor_forward(x, params, *, block_b=DEFAULT_BT):
    """Pallas forward pass. x: (B, INPUT_SIZE) float32 -> (B, 1) float32."""
    B, L = x.shape
    w_band, b_row, w_fold, b_fold = _prepare_weights(params, L)

    bt = min(block_b, _round_up(B, 8))          # batch tile, multiple of 8 sublanes
    grid = (pl.cdiv(B, bt),)                    # partial last block handled by Pallas

    flops = B * (2 * L * FEAT_PAD + 3 * FEAT_PAD + 2 * FEAT_PAD)
    bytes_accessed = (B * L + B) * 4 + (L * FEAT_PAD + 2 * FEAT_PAD + 1) * 4

    return pl.pallas_call(
        _kernel,
        out_shape=jax.ShapeDtypeStruct((B, 1), jnp.float32),
        grid=grid,
        in_specs=[
            pl.BlockSpec((bt, L), lambda i: (i, 0)),          # streamed batch tile
            pl.BlockSpec((L, FEAT_PAD), lambda i: (0, 0)),    # pinned weights
            pl.BlockSpec((1, FEAT_PAD), lambda i: (0, 0)),
            pl.BlockSpec((FEAT_PAD, 1), lambda i: (0, 0)),
            pl.BlockSpec((1, 1), lambda i: (0, 0)),
        ],
        out_specs=pl.BlockSpec((bt, 1), lambda i: (i, 0)),
        compiler_params=pltpu.CompilerParams(
            dimension_semantics=("parallel",),                # 2 TCs on v7x
            vmem_limit_bytes=32 * 1024 * 1024,
        ),
        cost_estimate=pl.CostEstimate(
            flops=int(flops), transcendentals=0, bytes_accessed=int(bytes_accessed)),
    )(x, w_band, b_row, w_fold, b_fold)


# ------------------------- pure-JAX reference & init --------------------------

def reference_forward(x, params):
    """Pure-JAX reference mirroring the PyTorch module exactly (unfolded)."""
    B = x.shape[0]
    xin = x[:, None, :]                                    # (B, 1, L)

    def conv_block(w2d, b, K):
        w = w2d.reshape(N_CH, 1, K)                        # (O, I, K)
        y = jax.lax.conv_general_dilated(
            xin, w, window_strides=(STRIDE,), padding="VALID",
            dimension_numbers=("NCH", "OIH", "NCH"))
        y = y + b[None, :, None]
        return jnp.where(y >= 0, y, NEG_SLOPE * y)

    x1 = conv_block(params["conv1_w"], params["conv1_b"], 1)
    x2 = conv_block(params["conv2_w"], params["conv2_b"], 3)
    x3 = conv_block(params["conv3_w"], params["conv3_b"], 5)
    xs = jnp.concatenate([x1, x2, x3], axis=-1)            # (B, 4, 72)
    flat = xs.reshape(B, -1)                               # (B, 288)
    h = flat @ params["fc1_w"].T + params["fc1_b"]
    return h @ params["fc2_w"].T + params["fc2_b"]


def init_params(key):
    ks = jax.random.split(key, 10)

    def kaiming_normal(k, shape, fan_in):                  # relu gain, like init_weights
        return jax.random.normal(k, shape, jnp.float32) * math.sqrt(2.0 / fan_in)

    def conv_default(kw, kb, out_c, ksize):                # PyTorch Conv1d default-style
        fan_in = 1 * ksize
        bound = 1.0 / math.sqrt(fan_in)
        w = jax.random.uniform(kw, (out_c, ksize), jnp.float32, -bound, bound)
        b = jax.random.uniform(kb, (out_c,), jnp.float32, -bound, bound)
        return w, b

    c1w, c1b = conv_default(ks[0], ks[1], N_CH, 1)
    c2w, c2b = conv_default(ks[2], ks[3], N_CH, 3)
    c3w, c3b = conv_default(ks[4], ks[5], N_CH, 5)
    fc1_w = kaiming_normal(ks[6], (16, N_CH * 72), N_CH * 72)
    fc1_b = jax.random.uniform(ks[7], (16,), jnp.float32,
                               -1.0 / math.sqrt(288.0), 1.0 / math.sqrt(288.0))
    fc2_w = kaiming_normal(ks[8], (1, 16), 16)
    fc2_b = jax.random.uniform(ks[9], (1,), jnp.float32,
                               -1.0 / math.sqrt(16.0), 1.0 / math.sqrt(16.0))
    return dict(conv1_w=c1w, conv1_b=c1b,
                conv2_w=c2w, conv2_b=c2b,
                conv3_w=c3w, conv3_b=c3b,
                fc1_w=fc1_w, fc1_b=fc1_b,
                fc2_w=fc2_w, fc2_b=fc2_b)


if __name__ == "__main__":
    key = jax.random.PRNGKey(0)
    pkey, xkey, xkey2 = jax.random.split(key, 3)
    params = init_params(pkey)

    # Small-shape check (batch=2) -- single partial tile.
    x = jax.random.normal(xkey, (2, INPUT_SIZE), dtype=jnp.float32)
    out = jax.block_until_ready(cnn_regressor_forward(x, params))
    ref = reference_forward(x, params)
    np.testing.assert_allclose(np.asarray(out), np.asarray(ref), rtol=1e-4, atol=1e-4)

    # Multi-step grid check (3 grid steps, last one partial) to exercise pipelining.
    x2 = jax.random.normal(xkey2, (300, INPUT_SIZE), dtype=jnp.float32)
    out2 = jax.block_until_ready(cnn_regressor_forward(x2, params, block_b=128))
    ref2 = reference_forward(x2, params)
    np.testing.assert_allclose(np.asarray(out2), np.asarray(ref2), rtol=1e-4, atol=1e-4)

    print("KERNEL_OK")
</pallas_src>

<mosaic_0001>
module attributes {stable_mosaic.version = 11 : i64} {
  func.func @_kernel(%arg0: i32, %arg1: memref<8x50xf32, #tpu.memory_space<vmem>>, %arg2: memref<50x384xf32, #tpu.memory_space<vmem>>, %arg3: memref<1x384xf32, #tpu.memory_space<vmem>>, %arg4: memref<384x1xf32, #tpu.memory_space<vmem>>, %arg5: memref<1x1xf32, #tpu.memory_space<vmem>>, %arg6: memref<8x1xf32, #tpu.memory_space<vmem>>) attributes {dimension_semantics = [#tpu.dimension_semantics<parallel>], iteration_bounds = array<i64: 1>, scalar_prefetch = 0 : i64, scratch_operands = 0 : i64, tpu.core_type = #tpu.core_type<tc>, window_params = [{transform_indices = @transform_0, window_bounds = array<i64: 8, 50>}, {pipeline_mode = #tpu.pipeline_mode<synchronous>, transform_indices = @transform_1, window_bounds = array<i64: 50, 384>}, {pipeline_mode = #tpu.pipeline_mode<synchronous>, transform_indices = @transform_2, window_bounds = array<i64: 1, 384>}, {pipeline_mode = #tpu.pipeline_mode<synchronous>, transform_indices = @transform_3, window_bounds = array<i64: 384, 1>}, {pipeline_mode = #tpu.pipeline_mode<synchronous>, transform_indices = @transform_4, window_bounds = array<i64: 1, 1>}, {transform_indices = @transform_5, window_bounds = array<i64: 8, 1>}]} {
    %c0 = arith.constant 0 : index
    %c0_0 = arith.constant 0 : index
    %0 = vector.load %arg1[%c0, %c0_0] : memref<8x50xf32, #tpu.memory_space<vmem>>, vector<8x50xf32>
    %c0_1 = arith.constant 0 : index
    %c0_2 = arith.constant 0 : index
    %1 = vector.load %arg2[%c0_1, %c0_2] : memref<50x384xf32, #tpu.memory_space<vmem>>, vector<50x384xf32>
    %cst = arith.constant dense<0.000000e+00> : vector<8x384xf32>
    %2 = tpu.matmul %0, %1, %cst {dimension_numbers = #tpu.dot_dimension_numbers<[1], [0], [0], [1], [0, 0, 1, 1], [], []>} : vector<8x50xf32>, vector<50x384xf32>, vector<8x384xf32> -> vector<8x384xf32>
    %c0_3 = arith.constant 0 : index
    %c0_4 = arith.constant 0 : index
    %3 = vector.load %arg3[%c0_3, %c0_4] : memref<1x384xf32, #tpu.memory_space<vmem>>, vector<1x384xf32>
    %4 = vector.broadcast %3 : vector<1x384xf32> to vector<8x384xf32>
    %5 = arith.addf %2, %4 : vector<8x384xf32>
    %cst_5 = arith.constant 0.000000e+00 : f32
    %6 = vector.broadcast %cst_5 : f32 to vector<8x384xf32>
    %7 = arith.cmpf oge, %5, %6 : vector<8x384xf32>
    %cst_6 = arith.constant 2.000000e-01 : f32
    %8 = vector.broadcast %cst_6 : f32 to vector<8x384xf32>
    %9 = arith.mulf %8, %5 : vector<8x384xf32>
    %10 = arith.select %7, %5, %9 : vector<8x384xi1>, vector<8x384xf32>
    %c0_7 = arith.constant 0 : index
    %c0_8 = arith.constant 0 : index
    %11 = vector.load %arg4[%c0_7, %c0_8] : memref<384x1xf32, #tpu.memory_space<vmem>>, vector<384x1xf32>
    %cst_9 = arith.constant dense<0.000000e+00> : vector<8x1xf32>
    %12 = tpu.matmul %10, %11, %cst_9 {dimension_numbers = #tpu.dot_dimension_numbers<[1], [0], [0], [1], [0, 0, 1, 1], [], []>} : vector<8x384xf32>, vector<384x1xf32>, vector<8x1xf32> -> vector<8x1xf32>
    %c0_10 = arith.constant 0 : index
    %c0_11 = arith.constant 0 : index
    %13 = vector.load %arg5[%c0_10, %c0_11] : memref<1x1xf32, #tpu.memory_space<vmem>>, vector<1x1xf32>
    %14 = vector.broadcast %13 : vector<1x1xf32> to vector<8x1xf32>
    %15 = arith.addf %12, %14 : vector<8x1xf32>
    %c0_12 = arith.constant 0 : index
    %c0_13 = arith.constant 0 : index
    %16 = vector.load %arg6[%c0_12, %c0_13] : memref<8x1xf32, #tpu.memory_space<vmem>>, vector<8x1xf32>
    tpu.vector_store %arg6[%c0_12, %c0_13], %15 {strides = array<i32>} : memref<8x1xf32, #tpu.memory_space<vmem>>, vector<8x1xf32>,
    return
  }
  func.func @transform_0(%arg0: i32) -> (i32, i32) {
    %c0_i32 = arith.constant 0 : i32
    %c0_i32_0 = arith.constant 0 : i32
    return %arg0, %c0_i32 : i32, i32
  }
  func.func @transform_1(%arg0: i32) -> (i32, i32) {
    %c0_i32 = arith.constant 0 : i32
    %c0_i32_0 = arith.constant 0 : i32
    %c0_i32_1 = arith.constant 0 : i32
    return %c0_i32, %c0_i32_0 : i32, i32
  }
  func.func @transform_2(%arg0: i32) -> (i32, i32) {
    %c0_i32 = arith.constant 0 : i32
    %c0_i32_0 = arith.constant 0 : i32
    %c0_i32_1 = arith.constant 0 : i32
    return %c0_i32, %c0_i32_0 : i32, i32
  }
  func.func @transform_3(%arg0: i32) -> (i32, i32) {
    %c0_i32 = arith.constant 0 : i32
    %c0_i32_0 = arith.constant 0 : i32
    %c0_i32_1 = arith.constant 0 : i32
    return %c0_i32, %c0_i32_0 : i32, i32
  }
  func.func @transform_4(%arg0: i32) -> (i32, i32) {
    %c0_i32 = arith.constant 0 : i32
    %c0_i32_0 = arith.constant 0 : i32
    %c0_i32_1 = arith.constant 0 : i32
    return %c0_i32, %c0_i32_0 : i32, i32
  }
  func.func @transform_5(%arg0: i32) -> (i32, i32) {
    %c0_i32 = arith.constant 0 : i32
    %c0_i32_0 = arith.constant 0 : i32
    return %arg0, %c0_i32 : i32, i32
  }
}

</mosaic_0001>

<llo_original>
// kernel: tpu_custom_call.1
$region0: #{tpu_custom_call.1}
  #allocation0 [shape = 'u32[]', space=smem, size = 0x4, offset = 0x4, fixed_abs, tag = 'smem constant byte address 0x4 - core index']
  #allocation1 [shape = 'u32[144,128]{1,0:T(1,128)}', space=vmem, size = 0x12000, scoped, tag = 'internal scratch']
  #allocation2 [shape = 'f32[1,1]{1,0:T(1,128)S(1)}', space=vmem, size = 0x200, scoped, tag = 'scoped memory for tpu_custom_call.1']
  %s0 = inlined_call_operand.vmem [shape: f32[2,50], index: 0, kind: input, shape index: {}]
  %s1 = inlined_call_operand.vmem [shape: f32[50,384], index: 1, kind: input, shape index: {}]
  %s2 = inlined_call_operand.vmem [shape: f32[1,384], index: 2, kind: input, shape index: {}]
  %s3 = inlined_call_operand.vmem [shape: f32[384,1], index: 3, kind: input, shape index: {}]
  %s4 = inlined_call_operand.<no memory space> [shape: f32[1,1], index: 4, kind: input, shape index: {}]
  %s5 = inlined_call_operand.vmem [shape: f32[2,1], index: 5, kind: output, shape index: {}]
  %s6 = sld [smem:[#allocation0]]
  $region60: #{tpu_custom_call.1} parent=0
    _
  %s8 = ssub.s32 1, %s6
  %s9 = scalar_select 0, %s8, %s6
  %v10 = vstv %s4
  %11 = vst [vmem:[#allocation2] sm:$0x1] %v10
  $region1: #{tpu_custom_call.1} parent=0
    #allocation3 [shape = 'u8[4096]{0}', space=vmem, size = 0x1000, scoped, tag = 'output window, operand 0, single buffered']
    // Predicated region
    $region2: #{tpu_custom_call.1} parent=1 // pred_check
      _
    $region3: #{tpu_custom_call.1} parent=1 // pred_check_branch
      %13 = sbr.rel (0) target = $region5
    $region4: #{tpu_custom_call.1} parent=1 // pred_region
      _
    $region5: #{tpu_custom_call.1} parent=1 // pred_fallthru
      _
    // Predicated region
    $region6: #{tpu_custom_call.1} parent=1 // pred_check
      _
    $region7: #{tpu_custom_call.1} parent=1 // pred_check_branch
      %15 = sbr.rel (0) target = $region9
    $region8: #{tpu_custom_call.1} parent=1 // pred_region
      _
    $region9: #{tpu_custom_call.1} parent=1 // pred_fallthru
      _
    // Predicated region
    $region10: #{tpu_custom_call.1} parent=1 // pred_check
      _
    $region11: #{tpu_custom_call.1} parent=1 // pred_check_branch
      %17 = sbr.rel (0) target = $region13
    $region12: #{tpu_custom_call.1} parent=1 // pred_region
      _
    $region13: #{tpu_custom_call.1} parent=1 // pred_fallthru
      _
    // Predicated region
    $region14: #{tpu_custom_call.1} parent=1 // pred_check
      _
    $region15: #{tpu_custom_call.1} parent=1 // pred_check_branch
      %19 = sbr.rel (0) target = $region17
    $region16: #{tpu_custom_call.1} parent=1 // pred_region
      _
    $region17: #{tpu_custom_call.1} parent=1 // pred_fallthru
      _
    // Predicated region
    $region18: #{tpu_custom_call.1} parent=1 // pred_check
      _
    $region19: #{tpu_custom_call.1} parent=1 // pred_check_branch
      %21 = sbr.rel (0) target = $region21
    $region20: #{tpu_custom_call.1} parent=1 // pred_region
      _
    $region21: #{tpu_custom_call.1} parent=1 // pred_fallthru
      _
    %v22 = vld [vmem:[%s0] sm:$0xff]
    %v23 = vld [vmem:[%s1] sm:$0xff]
    %v24 = vld [vmem:[%s1 + $0x8] sm:$0xff]
    %v25 = vld [vmem:[%s1 + $0x10] sm:$0xff]
    %v26 = vld [vmem:[%s1 + $0x18] sm:$0xff]
    %v27 = vld [vmem:[%s1 + $0x20] sm:$0xff]
    %v28 = vld [vmem:[%s1 + $0x28] sm:$0xff]
    %v29 = vld [vmem:[%s1 + $0x30] sm:$0xff]
    %v30 = vld [vmem:[%s1 + $0x38] sm:$0xff]
    %v31 = vld [vmem:[%s1 + $0x40] sm:$0xff]
    %v32 = vld [vmem:[%s1 + $0x48] sm:$0xff]
    %v33 = vld [vmem:[%s1 + $0x50] sm:$0xff]
    %v34 = vld [vmem:[%s1 + $0x58] sm:$0xff]
    %v35 = vld [vmem:[%s1 + $0x60] sm:$0xff]
    %v36 = vld [vmem:[%s1 + $0x68] sm:$0xff]
    %v37 = vld [vmem:[%s1 + $0x70] sm:$0xff]
    %v38 = vld [vmem:[%s1 + $0x78] sm:$0xff]
    %v39 = vld [vmem:[%s1 + $0x80] sm:$0xff]
    %v40 = vld [vmem:[%s1 + $0x88] sm:$0xff]
    %v41 = vld [vmem:[%s1 + $0x90] sm:$0x3]
    %v42 = vld [vmem:[%s1 + $0x98] sm:$0x3]
    %v43 = vld [vmem:[%s1 + $0xa0] sm:$0x3]
    %v44 = vld [vmem:[%s2] sm:$0x7]
    %v46 = vlaneseq
    %v47 = vshrl.u32 %v46, 7
    %v48 = vsub.s32 0, %v47
    %v49 = vrot.slane %v44, %v48
    %v50 = vlaneseq
    %v51 = vshrl.u32 %v50, 7
    %v52 = vsub.s32 1, %v51
    %v53 = vrot.slane %v44, %v52
    %v54 = vlaneseq
    %v55 = vshrl.u32 %v54, 7
    %v56 = vsub.s32 2, %v55
    %v57 = vrot.slane %v44, %v56
    %vm61 = vcmask 408576
    %v63 = vsel %vm61, %v22, 0
    %vm65 = vcmask 1041408
    %v67 = vsel %vm65, %v41, 0
    %v70 = vsel %vm65, %v42, 0
    %v73 = vsel %vm65, %v43, 0
    %75 = vmatprep.subr.mxu0 %v24
    %76 = vmatpush1.msra.mxu0 %v23
    %77 = vmatprep.subr.mxu0 %v27
    %78 = vmatpush1.msra.mxu0 %v26
    %79 = vmatprep.subr.mxu0 %v30
    %80 = vmatpush1.msra.mxu0 %v29
    %81 = vmatprep.subr.mxu0 %v33
    %82 = vmatpush1.msra.mxu0 %v32
    %83 = vmatprep.subr.mxu0 %v36
    %84 = vmatpush1.msra.mxu0 %v35
    %85 = vmatprep.subr.mxu0 %v39
    %86 = vmatpush1.msra.mxu0 %v38
    %87 = vmatprep.subr.mxu0 %v70
    %88 = vmatpush1.msra.mxu0 %v67
    %89 = vmatprep.subr.mxu0 0.0
    %90 = vmatpush1.msra.mxu0 0.0
    %91 = vmatprep.subr.mxu0 0.0
    %92 = vmatpush1.msra.mxu0 0.0
    %93 = vmatprep.subr.mxu0 0.0
    %94 = vmatpush1.msra.mxu0 0.0
    %95 = vmatprep.subr.mxu0 0.0
    %96 = vmatpush1.msra.mxu0 0.0
    %97 = vmatprep.subr.mxu0 0.0
    %98 = vmatpush1.msra.mxu0 0.0
    %99 = vmatprep.subr.mxu0 0.0
    %100 = vmatpush1.msra.mxu0 0.0
    %101 = vmatprep.subr.mxu0 0.0
    %102 = vmatpush1.msra.mxu0 0.0
    %103 = vmatprep.subr.mxu0 0.0
    %104 = vmatpush1.msra.mxu0 0.0
    %105 = vmatprep.subr.mxu0 0.0
    %106 = vmatpush1.msra.mxu0 0.0
    %107 = vmatprep.subr.mxu0 0.0
    %108 = vmatpush1.msra.mxu0 0.0
    %109 = vmatprep.subr.mxu0 0.0
    %110 = vmatpush1.msra.mxu0 0.0
    %111 = vmatprep.subr.mxu0 0.0
    %112 = vmatpush1.msra.mxu0 0.0
    %113 = vmatprep.subr.mxu0 0.0
    %114 = vmatpush1.msra.mxu0 0.0
    %115 = vmatprep.subr.mxu0 0.0
    %116 = vmatpush1.msra.mxu0 0.0
    %117 = vmatprep.subr.mxu0 0.0
    %118 = vmatpush1.msra.mxu0 0.0
    %119 = vmatprep.subr.mxu0 0.0
    %120 = vmatpush1.msra.mxu0 0.0
    %121 = vmatprep.subr.mxu0 0.0
    %122 = vmatpush1.msra.mxu0 0.0
    %123 = vmatprep.subr.mxu0 0.0
    %124 = vmatpush1.msra.mxu0 0.0
    %125 = vmatprep.subr.mxu0 0.0
    %126 = vmatpush1.msra.mxu0 0.0
    %127 = vmatprep.subr.mxu0 0.0
    %128 = vmatpush1.msra.mxu0 0.0
    %129 = vmatprep.subr.mxu0 0.0
    %130 = vmatpush1.msra.mxu0 0.0
    %131 = vmatprep.subr.mxu0 0.0
    %132 = vmatpush1.msra.mxu0 0.0
    %133 = vmatprep.subr.mxu0 0.0
    %134 = vmatpush1.msra.mxu0 0.0
    %135 = vmatprep.subr.mxu0 0.0
    %136 = vmatpush1.msra.mxu0 0.0
    %137 = vmatprep.subr.mxu0 0.0
    %138 = vmatpush1.msra.mxu0 0.0
    %139 = vmatprep.mubr.f32.mxu0 0.0
    %140 = vmatmul.mubr.f32.gmra.mrb[0].mxu0 %v63
    %v141 = vpop.f32.mrb[0].mxu0
    %v142 = vadd.f32 %v49, %v141
    %v143 = vpop.f32.mrb[0].mxu0
    %v144 = vadd.f32 %v53, %v143
    %145 = vdwg.mxu0
    %146 = vmatprep.subr.mxu0 0.0
    %147 = vmatpush1.msra.mxu0 %v25
    %148 = vmatprep.subr.mxu0 0.0
    %149 = vmatpush1.msra.mxu0 %v28
    %150 = vmatprep.subr.mxu0 0.0
    %151 = vmatpush1.msra.mxu0 %v31
    %152 = vmatprep.subr.mxu0 0.0
    %153 = vmatpush1.msra.mxu0 %v34
    %154 = vmatprep.subr.mxu0 0.0
    %155 = vmatpush1.msra.mxu0 %v37
    %156 = vmatprep.subr.mxu0 0.0
    %157 = vmatpush1.msra.mxu0 %v40
    %158 = vmatprep.subr.mxu0 0.0
    %159 = vmatpush1.msra.mxu0 %v73
    %160 = vmatprep.subr.mxu0 0.0
    %161 = vmatpush1.msra.mxu0 0.0
    %162 = vmatprep.subr.mxu0 0.0
    %163 = vmatpush1.msra.mxu0 0.0
    %164 = vmatprep.subr.mxu0 0.0
    %165 = vmatpush1.msra.mxu0 0.0
    %166 = vmatprep.subr.mxu0 0.0
    %167 = vmatpush1.msra.mxu0 0.0
    %168 = vmatprep.subr.mxu0 0.0
    %169 = vmatpush1.msra.mxu0 0.0
    %170 = vmatprep.subr.mxu0 0.0
    %171 = vmatpush1.msra.mxu0 0.0
    %172 = vmatprep.subr.mxu0 0.0
    %173 = vmatpush1.msra.mxu0 0.0
    %174 = vmatprep.subr.mxu0 0.0
    %175 = vmatpush1.msra.mxu0 0.0
    %176 = vmatprep.subr.mxu0 0.0
    %177 = vmatpush1.msra.mxu0 0.0
    %178 = vmatprep.subr.mxu0 0.0
    %179 = vmatpush1.msra.mxu0 0.0
    %180 = vmatprep.subr.mxu0 0.0
    %181 = vmatpush1.msra.mxu0 0.0
    %182 = vmatprep.subr.mxu0 0.0
    %183 = vmatpush1.msra.mxu0 0.0
    %184 = vmatprep.subr.mxu0 0.0
    %185 = vmatpush1.msra.mxu0 0.0
    %186 = vmatprep.subr.mxu0 0.0
    %187 = vmatpush1.msra.mxu0 0.0
    %188 = vmatprep.subr.mxu0 0.0
    %189 = vmatpush1.msra.mxu0 0.0
    %190 = vmatprep.subr.mxu0 0.0
    %191 = vmatpush1.msra.mxu0 0.0
    %192 = vmatprep.subr.mxu0 0.0
    %193 = vmatpush1.msra.mxu0 0.0
    %194 = vmatprep.subr.mxu0 0.0
    %195 = vmatpush1.msra.mxu0 0.0
    %196 = vmatprep.subr.mxu0 0.0
    %197 = vmatpush1.msra.mxu0 0.0
    %198 = vmatprep.subr.mxu0 0.0
    %199 = vmatpush1.msra.mxu0 0.0
    %200 = vmatprep.subr.mxu0 0.0
    %201 = vmatpush1.msra.mxu0 0.0
    %202 = vmatprep.subr.mxu0 0.0
    %203 = vmatpush1.msra.mxu0 0.0
    %204 = vmatprep.subr.mxu0 0.0
    %205 = vmatpush1.msra.mxu0 0.0
    %206 = vmatprep.subr.mxu0 0.0
    %207 = vmatpush1.msra.mxu0 0.0
    %208 = vmatprep.subr.mxu0 0.0
    %209 = vmatpush1.msra.mxu0 0.0
    %210 = vmatprep.mubr.f32.mxu0 0.0
    %211 = vmatmul.mubr.f32.gmra.mrb[0].mxu0 %v63
    %v212 = vpop.f32.mrb[0].mxu0
    %v213 = vadd.f32 %v57, %v212
    %v214 = vpop.f32.mrb[0].mxu0
    %215 = vdwg.mxu0
    %vm216 = vcmp.ge.f32.partialorder %v142, 0.0
    %vm217 = vcmp.ge.f32.partialorder %v144, 0.0
    %vm218 = vcmp.ge.f32.partialorder %v213, 0.0
    %v219 = vmul.f32 %v142, 0.2
    %v220 = vmul.f32 %v144, 0.2
    %v221 = vmul.f32 %v213, 0.2
    %v222 = vsel %vm216, %v142, %v219
    %v223 = vsel %vm217, %v144, %v220
    %v224 = vsel %vm218, %v213, %v221
    %v225 = vld [vmem:[%s3] sm:$0xff]
    %v226 = vld [vmem:[%s3 + $0x8] sm:$0xff]
    %v227 = vld [vmem:[%s3 + $0x10] sm:$0xff]
    %v228 = vld [vmem:[%s3 + $0x18] sm:$0xff]
    %v229 = vld [vmem:[%s3 + $0x20] sm:$0xff]
    %v230 = vld [vmem:[%s3 + $0x28] sm:$0xff]
    %v231 = vld [vmem:[%s3 + $0x30] sm:$0xff]
    %v232 = vld [vmem:[%s3 + $0x38] sm:$0xff]
    %v233 = vld [vmem:[%s3 + $0x40] sm:$0xff]
    %v234 = vld [vmem:[%s3 + $0x48] sm:$0xff]
    %v235 = vld [vmem:[%s3 + $0x50] sm:$0xff]
    %v236 = vld [vmem:[%s3 + $0x58] sm:$0xff]
    %v237 = vld [vmem:[%s3 + $0x60] sm:$0xff]
    %v238 = vld [vmem:[%s3 + $0x68] sm:$0xff]
    %v239 = vld [vmem:[%s3 + $0x70] sm:$0xff]
    %v240 = vld [vmem:[%s3 + $0x78] sm:$0xff]
    %v241 = vld [vmem:[%s3 + $0x80] sm:$0xff]
    %v242 = vld [vmem:[%s3 + $0x88] sm:$0xff]
    %v243 = vld [vmem:[%s3 + $0x90] sm:$0xff]
    %v244 = vld [vmem:[%s3 + $0x98] sm:$0xff]
    %v245 = vld [vmem:[%s3 + $0xa0] sm:$0xff]
    %v246 = vld [vmem:[%s3 + $0xa8] sm:$0xff]
    %v247 = vld [vmem:[%s3 + $0xb0] sm:$0xff]
    %v248 = vld [vmem:[%s3 + $0xb8] sm:$0xff]
    %v249 = vld [vmem:[%s3 + $0xc0] sm:$0xff]
    %v250 = vld [vmem:[%s3 + $0xc8] sm:$0xff]
    %v251 = vld [vmem:[%s3 + $0xd0] sm:$0xff]
    %v252 = vld [vmem:[%s3 + $0xd8] sm:$0xff]
    %v253 = vld [vmem:[%s3 + $0xe0] sm:$0xff]
    %v254 = vld [vmem:[%s3 + $0xe8] sm:$0xff]
    %v255 = vld [vmem:[%s3 + $0xf0] sm:$0xff]
    %v256 = vld [vmem:[%s3 + $0xf8] sm:$0xff]
    %v257 = vld [vmem:[%s3 + $0x100] sm:$0xff]
    %v258 = vld [vmem:[%s3 + $0x108] sm:$0xff]
    %v259 = vld [vmem:[%s3 + $0x110] sm:$0xff]
    %v260 = vld [vmem:[%s3 + $0x118] sm:$0xff]
    %v261 = vld [vmem:[%s3 + $0x120] sm:$0xff]
    %v262 = vld [vmem:[%s3 + $0x128] sm:$0xff]
    %v263 = vld [vmem:[%s3 + $0x130] sm:$0xff]
    %v264 = vld [vmem:[%s3 + $0x138] sm:$0xff]
    %v265 = vld [vmem:[%s3 + $0x140] sm:$0xff]
    %v266 = vld [vmem:[%s3 + $0x148] sm:$0xff]
    %v267 = vld [vmem:[%s3 + $0x150] sm:$0xff]
    %v268 = vld [vmem:[%s3 + $0x158] sm:$0xff]
    %v269 = vld [vmem:[%s3 + $0x160] sm:$0xff]
    %v270 = vld [vmem:[%s3 + $0x168] sm:$0xff]
    %v271 = vld [vmem:[%s3 + $0x170] sm:$0xff]
    %v272 = vld [vmem:[%s3 + $0x178] sm:$0xff]
    %v273 = vld [vmem:[#allocation2] sm:$0x1]
    %v275 = vlaneseq
    %v276 = vshrl.u32 %v275, 7
    %v277 = vsub.s32 0, %v276
    %v278 = vrot.slane %v273, %v277
    %280 = vmatprep.subr.mxu0 0.0
    %281 = vmatpush1.msra.mxu0 %v225
    %282 = vmatprep.subr.mxu0 0.0
    %283 = vmatpush1.msra.mxu0 %v226
    %284 = vmatprep.subr.mxu0 0.0
    %285 = vmatpush1.msra.mxu0 %v227
    %286 = vmatprep.subr.mxu0 0.0
    %287 = vmatpush1.msra.mxu0 %v228
    %288 = vmatprep.subr.mxu0 0.0
    %289 = vmatpush1.msra.mxu0 %v229
    %290 = vmatprep.subr.mxu0 0.0
    %291 = vmatpush1.msra.mxu0 %v230
    %292 = vmatprep.subr.mxu0 0.0
    %293 = vmatpush1.msra.mxu0 %v231
    %294 = vmatprep.subr.mxu0 0.0
    %295 = vmatpush1.msra.mxu0 %v232
    %296 = vmatprep.subr.mxu0 0.0
    %297 = vmatpush1.msra.mxu0 %v233
    %298 = vmatprep.subr.mxu0 0.0
    %299 = vmatpush1.msra.mxu0 %v234
    %300 = vmatprep.subr.mxu0 0.0
    %301 = vmatpush1.msra.mxu0 %v235
    %302 = vmatprep.subr.mxu0 0.0
    %303 = vmatpush1.msra.mxu0 %v236
    %304 = vmatprep.subr.mxu0 0.0
    %305 = vmatpush1.msra.mxu0 %v237
    %306 = vmatprep.subr.mxu0 0.0
    %307 = vmatpush1.msra.mxu0 %v238
    %308 = vmatprep.subr.mxu0 0.0
    %309 = vmatpush1.msra.mxu0 %v239
    %310 = vmatprep.subr.mxu0 0.0
    %311 = vmatpush1.msra.mxu0 %v240
    %312 = vmatprep.subr.mxu0 0.0
    %313 = vmatpush1.msra.mxu0 %v241
    %314 = vmatprep.subr.mxu0 0.0
    %315 = vmatpush1.msra.mxu0 %v242
    %316 = vmatprep.subr.mxu0 0.0
    %317 = vmatpush1.msra.mxu0 %v243
    %318 = vmatprep.subr.mxu0 0.0
    %319 = vmatpush1.msra.mxu0 %v244
    %320 = vmatprep.subr.mxu0 0.0
    %321 = vmatpush1.msra.mxu0 %v245
    %322 = vmatprep.subr.mxu0 0.0
    %323 = vmatpush1.msra.mxu0 %v246
    %324 = vmatprep.subr.mxu0 0.0
    %325 = vmatpush1.msra.mxu0 %v247
    %326 = vmatprep.subr.mxu0 0.0
    %327 = vmatpush1.msra.mxu0 %v248
    %328 = vmatprep.subr.mxu0 0.0
    %329 = vmatpush1.msra.mxu0 %v249
    %330 = vmatprep.subr.mxu0 0.0
    %331 = vmatpush1.msra.mxu0 %v250
    %332 = vmatprep.subr.mxu0 0.0
    %333 = vmatpush1.msra.mxu0 %v251
    %334 = vmatprep.subr.mxu0 0.0
    %335 = vmatpush1.msra.mxu0 %v252
    %336 = vmatprep.subr.mxu0 0.0
    %337 = vmatpush1.msra.mxu0 %v253
    %338 = vmatprep.subr.mxu0 0.0
    %339 = vmatpush1.msra.mxu0 %v254
    %340 = vmatprep.subr.mxu0 0.0
    %341 = vmatpush1.msra.mxu0 %v255
    %342 = vmatprep.subr.mxu0 0.0
    %343 = vmatpush1.msra.mxu0 %v256
    %344 = vmatprep.mubr.f32.mxu0 %v223
    %345 = vmatmul.mubr.f32.gmra.mrb[0].mxu0 %v222
    %v346 = vpop.f32.mrb[0].mxu0
    %v347 = vadd.f32 %v278, %v346
    %v348 = vpop.f32.mrb[0].mxu0
    %349 = vdwg.mxu0
    %350 = vmatprep.subr.mxu0 0.0
    %351 = vmatpush1.msra.mxu0 %v257
    %352 = vmatprep.subr.mxu0 0.0
    %353 = vmatpush1.msra.mxu0 %v258
    %354 = vmatprep.subr.mxu0 0.0
    %355 = vmatpush1.msra.mxu0 %v259
    %356 = vmatprep.subr.mxu0 0.0
    %357 = vmatpush1.msra.mxu0 %v260
    %358 = vmatprep.subr.mxu0 0.0
    %359 = vmatpush1.msra.mxu0 %v261
    %360 = vmatprep.subr.mxu0 0.0
    %361 = vmatpush1.msra.mxu0 %v262
    %362 = vmatprep.subr.mxu0 0.0
    %363 = vmatpush1.msra.mxu0 %v263
    %364 = vmatprep.subr.mxu0 0.0
    %365 = vmatpush1.msra.mxu0 %v264
    %366 = vmatprep.subr.mxu0 0.0
    %367 = vmatpush1.msra.mxu0 %v265
    %368 = vmatprep.subr.mxu0 0.0
    %369 = vmatpush1.msra.mxu0 %v266
    %370 = vmatprep.subr.mxu0 0.0
    %371 = vmatpush1.msra.mxu0 %v267
    %372 = vmatprep.subr.mxu0 0.0
    %373 = vmatpush1.msra.mxu0 %v268
    %374 = vmatprep.subr.mxu0 0.0
    %375 = vmatpush1.msra.mxu0 %v269
    %376 = vmatprep.subr.mxu0 0.0
    %377 = vmatpush1.msra.mxu0 %v270
    %378 = vmatprep.subr.mxu0 0.0
    %379 = vmatpush1.msra.mxu0 %v271
    %380 = vmatprep.subr.mxu0 0.0
    %381 = vmatpush1.msra.mxu0 %v272
    %382 = vmatprep.subr.mxu0 0.0
    %383 = vmatpush1.msra.mxu0 0.0
    %384 = vmatprep.subr.mxu0 0.0
    %385 = vmatpush1.msra.mxu0 0.0
    %386 = vmatprep.subr.mxu0 0.0
    %387 = vmatpush1.msra.mxu0 0.0
    %388 = vmatprep.subr.mxu0 0.0
    %389 = vmatpush1.msra.mxu0 0.0
    %390 = vmatprep.subr.mxu0 0.0
    %391 = vmatpush1.msra.mxu0 0.0
    %392 = vmatprep.subr.mxu0 0.0
    %393 = vmatpush1.msra.mxu0 0.0
    %394 = vmatprep.subr.mxu0 0.0
    %395 = vmatpush1.msra.mxu0 0.0
    %396 = vmatprep.subr.mxu0 0.0
    %397 = vmatpush1.msra.mxu0 0.0
    %398 = vmatprep.subr.mxu0 0.0
    %399 = vmatpush1.msra.mxu0 0.0
    %400 = vmatprep.subr.mxu0 0.0
    %401 = vmatpush1.msra.mxu0 0.0
    %402 = vmatprep.subr.mxu0 0.0
    %403 = vmatpush1.msra.mxu0 0.0
    %404 = vmatprep.subr.mxu0 0.0
    %405 = vmatpush1.msra.mxu0 0.0
    %406 = vmatprep.subr.mxu0 0.0
    %407 = vmatpush1.msra.mxu0 0.0
    %408 = vmatprep.subr.mxu0 0.0
    %409 = vmatpush1.msra.mxu0 0.0
    %410 = vmatprep.subr.mxu0 0.0
    %411 = vmatpush1.msra.mxu0 0.0
    %412 = vmatprep.subr.mxu0 0.0
    %413 = vmatpush1.msra.mxu0 0.0
    %414 = vmatprep.mubr.f32.mxu0 0.0
    %415 = vmatmul.mubr.f32.gmra.mrb[0].mxu0 %v224
    %v416 = vpop.f32.mrb[0].mxu0
    %v417 = vadd.f32 %v347, %v416
    %v418 = vpop.f32.mrb[0].mxu0
    %419 = vdwg.mxu0
    %vm420 = vcmask 7168
    %421 = vst.msk [vmem:[#allocation3] sm:$0xff] %vm420, %v417
    // Predicated region
    $region22: #{tpu_custom_call.1} parent=1 // pred_check
      _
    $region23: #{tpu_custom_call.1} parent=1 // pred_check_branch
      %423 = sbr.rel (0) target = $region25
    $region24: #{tpu_custom_call.1} parent=1 // pred_region
      // Predicated region
      $region26: #{tpu_custom_call.1} parent=24 // pred_check
        _
      $region27: #{tpu_custom_call.1} parent=24 // pred_check_branch
        %425 = sbr.rel (0) target = $region29
      $region28: #{tpu_custom_call.1} parent=24 // pred_region
        // Predicated region
        $region30: #{tpu_custom_call.1} parent=28 // pred_check
          _
        $region31: #{tpu_custom_call.1} parent=28 // pred_check_branch
          %427 = sbr.rel target = $region33
        $region32: #{tpu_custom_call.1} parent=28 // pred_region
          // Predicated region
          $region45: #{tpu_custom_call.1} parent=32 // pred_check
            _
          $region46: #{tpu_custom_call.1} parent=32 // pred_check_branch
            %442 = sbr.rel (0) target = $region48
          $region47: #{tpu_custom_call.1} parent=32 // pred_region
            loop: start=0, step=1, limit=1
            $region49: #{tpu_custom_call.1} parent=47 // loop_pre_header
              _
            $region50: #{tpu_custom_call.1} parent=47 // loop_header
              %s445 = sphi 0, %s449
              %p446 = scmp.ge.s32.totalorder %s445, 1
              %s450 = sphi [#allocation3], [#allocation3]
              %s451 = sphi %s5, %s5
            $region51: #{tpu_custom_call.1} parent=47 // loop_header_branch
              %448 = sbr.rel (%p446) target = $region55
            $region52: #{tpu_custom_call.1} parent=47 // loop_body
              %v452 = vld [vmem:[%s450] sm:$0x3]
              %453 = vst [vmem:[%s451] sm:$0x3] %v452
            $region53: #{tpu_custom_call.1} parent=47 // loop_footer
              %s449 = sadd.s32 1, %s445
            $region54: #{tpu_custom_call.1} parent=47 // loop_footer_branch
              %444 = sbr.rel target = $region50
            $region55: #{tpu_custom_call.1} parent=47 // loop_exit
              _
          $region48: #{tpu_custom_call.1} parent=32 // pred_fallthru
            _
        $region33: #{tpu_custom_call.1} parent=28 // pred_fallthru
          _
        // Predicated region
        $region34: #{tpu_custom_call.1} parent=28 // pred_check
          _
        $region35: #{tpu_custom_call.1} parent=28 // pred_check_branch
          %429 = sbr.rel (0) target = $region37
        $region36: #{tpu_custom_call.1} parent=28 // pred_region
          loop: start=0, step=1, limit=1
          $region38: #{tpu_custom_call.1} parent=36 // loop_pre_header
            _
          $region39: #{tpu_custom_call.1} parent=36 // loop_header
            %s432 = sphi 0, %s436
            %p433 = scmp.ge.s32.totalorder %s432, 1
            %s437 = sphi [#allocation3], [#allocation3]
            %s438 = sphi %s5, %s5
          $region40: #{tpu_custom_call.1} parent=36 // loop_header_branch
            %435 = sbr.rel (%p433) target = $region44
          $region41: #{tpu_custom_call.1} parent=36 // loop_body
            %v439 = vld [vmem:[%s437] sm:$0x3]
            %440 = vst [vmem:[%s438] sm:$0x3] %v439
          $region42: #{tpu_custom_call.1} parent=36 // loop_footer
            %s436 = sadd.s32 1, %s432
          $region43: #{tpu_custom_call.1} parent=36 // loop_footer_branch
            %431 = sbr.rel target = $region39
          $region44: #{tpu_custom_call.1} parent=36 // loop_exit
            _
        $region37: #{tpu_custom_call.1} parent=28 // pred_fallthru
          _
      $region29: #{tpu_custom_call.1} parent=24 // pred_fallthru
        _
      %454 = vnop
    $region25: #{tpu_custom_call.1} parent=1 // pred_fallthru
      _
    // Predicated region
    $region56: #{tpu_custom_call.1} parent=1 // pred_check
      _
    $region57: #{tpu_custom_call.1} parent=1 // pred_check_branch
      %456 = sbr.rel (0) target = $region59
    $region58: #{tpu_custom_call.1} parent=1 // pred_region
      _
    $region59: #{tpu_custom_call.1} parent=1 // pred_fallthru
      _

</llo_original>
